<compile_context>
chip_gen: v5e
topology: v5e:2x2
jax: 0.10.0
libtpu: 0.0.40
codegen_flags: <defaults>
</compile_context>

<pallas_src>
import functools

import jax
import jax.numpy as jnp
from jax import lax
from jax.experimental import pallas as pl
from jax.experimental.pallas import tpu as pltpu


# ----------------------------------------------------------------------------
# Fused Pallas kernel: num_layers x LSTM (single time loop) + Linear(H, 2)
# ----------------------------------------------------------------------------
def make_fused_kernel(num_layers, T, B, H):
    def kernel(*refs):
        # refs: x(T*B,D), w_ih0(D,4H), w_hh0(H,4H), b0(1,4H),
        #       [w_pack_l(2H,4H), b_l(1,4H)] * (num_layers-1),
        #       w_fc(H,2), b_fc(1,2), out(B,2)
        x_ref = refs[0]
        w_ih0_ref, w_hh0_ref, b0_ref = refs[1], refs[2], refs[3]
        upper_refs = refs[4:4 + 2 * (num_layers - 1)]
        w_fc_ref = refs[4 + 2 * (num_layers - 1)]
        b_fc_ref = refs[5 + 2 * (num_layers - 1)]
        out_ref = refs[6 + 2 * (num_layers - 1)]

        # Hoisted per-lane activation constants. Gate order along 4H is
        # [i, f, g, o]; i/f/o are sigmoid, g is tanh. Using
        # sigmoid(x) = 0.5*tanh(0.5*x) + 0.5 collapses everything to ONE
        # full-width tanh per step plus two cheap VALU ops.
        lane = lax.broadcasted_iota(jnp.int32, (B, 4 * H), 1)
        g_mask = (lane >= 2 * H) & (lane < 3 * H)
        act_scale = jnp.where(g_mask, 1.0, 0.5)     # pre-tanh scale
        act_add = jnp.where(g_mask, 0.0, 0.5)       # post-tanh affine

        def lstm_cell(gates, c_prev):
            act = act_scale * jnp.tanh(gates * act_scale) + act_add
            i_g = act[:, 0 * H:1 * H]
            f_g = act[:, 1 * H:2 * H]
            g_g = act[:, 2 * H:3 * H]
            o_g = act[:, 3 * H:4 * H]
            c_new = f_g * c_prev + i_g * g_g
            h_new = o_g * jnp.tanh(c_new)
            return h_new, c_new

        # Layer-0 input projection hoisted out of the recurrence (+bias once).
        seq2d = x_ref[...]                                        # (T*B, D)
        gx0 = jnp.dot(seq2d, w_ih0_ref[...],
                      preferred_element_type=jnp.float32) + b0_ref[...]

        w_hh0 = w_hh0_ref[...]                                    # (H, 4H)
        w_pack = [upper_refs[2 * i][...] for i in range(num_layers - 1)]
        b_up = [upper_refs[2 * i + 1][...] for i in range(num_layers - 1)]

        h = [jnp.zeros((B, H), jnp.float32) for _ in range(num_layers)]
        c = [jnp.zeros((B, H), jnp.float32) for _ in range(num_layers)]

        # Single fused, unrolled time loop over all layers. All steps live in
        # one basic block, so upper-layer step t overlaps lower-layer step t+1.
        for t in range(T):
            gates0 = gx0[t * B:(t + 1) * B, :] + jnp.dot(
                h[0], w_hh0, preferred_element_type=jnp.float32)  # (B, 4H)
            h[0], c[0] = lstm_cell(gates0, c[0])
            for l in range(1, num_layers):
                lhs = jnp.concatenate([h[l - 1], h[l]], axis=1)   # (B, 2H)
                gates_l = jnp.dot(lhs, w_pack[l - 1],
                                  preferred_element_type=jnp.float32) + b_up[l - 1]
                h[l], c[l] = lstm_cell(gates_l, c[l])

        # Final Linear(H, 2) on the last layer's last hidden state.
        out_ref[...] = (
            jnp.dot(h[num_layers - 1], w_fc_ref[...],
                    preferred_element_type=jnp.float32) + b_fc_ref[...]
        )

    return kernel


# ----------------------------------------------------------------------------
# Wrapper
# ----------------------------------------------------------------------------
@functools.partial(jax.jit, static_argnames=("num_layers",))
def lstm_forward(x, params, num_layers):
    """x: (B, T, input_size)  ->  (B, 2), matching the PyTorch module."""
    B, T, D = x.shape
    H = params["layer0"][1].shape[0]

    # Time-major flatten done in XLA (fuses with the transpose) so the kernel
    # sees a single lane-dense (T*B, D) slab instead of 8 padded tiles.
    x_flat = jnp.transpose(x, (1, 0, 2)).reshape(T * B, D)

    flat_args = [x_flat]
    w_ih0, w_hh0, b0 = params["layer0"]
    flat_args += [w_ih0, w_hh0, b0]
    for layer in range(1, num_layers):
        w_ih_t, w_hh_t, b = params[f"layer{layer}"]
        # Pack [W_ih ; W_hh] -> (2H, 4H) so each upper-layer step is ONE matmul.
        flat_args += [jnp.concatenate([w_ih_t, w_hh_t], axis=0), b]
    flat_args += list(params["fc"])

    n_in = len(flat_args)

    flops = (2 * T * B * D * 4 * H                               # layer-0 input proj
             + T * 2 * B * H * 4 * H                             # layer-0 recurrence
             + (num_layers - 1) * T * 2 * B * (2 * H) * (4 * H)  # upper layers
             + 2 * B * H * 2)                                    # fc
    transcendentals = num_layers * T * (B * 4 * H + B * H)       # gate tanh + c tanh
    bytes_accessed = 4 * (T * B * D + D * 4 * H + H * 4 * H + 4 * H
                          + (num_layers - 1) * (2 * H * 4 * H + 4 * H)
                          + H * 2 + 2 + B * 2)

    kernel = make_fused_kernel(num_layers, T, B, H)
    return pl.pallas_call(
        kernel,
        out_shape=jax.ShapeDtypeStruct((B, 2), jnp.float32),
        in_specs=[pl.BlockSpec(memory_space=pltpu.MemorySpace.VMEM)] * n_in,
        out_specs=pl.BlockSpec(memory_space=pltpu.MemorySpace.VMEM),
        cost_estimate=pl.CostEstimate(flops=flops,
                                      transcendentals=transcendentals,
                                      bytes_accessed=bytes_accessed),
    )(*flat_args)


# ----------------------------------------------------------------------------
# Pure-JAX reference (for correctness check)
# ----------------------------------------------------------------------------
def lstm_forward_ref(x, params, num_layers):
    B, T, _ = x.shape
    h_seq = x
    for layer in range(num_layers):
        w_ih_t, w_hh_t, b = params[f"layer{layer}"]
        H = w_hh_t.shape[0]

        def step(carry, x_t):
            h, c = carry
            gates = x_t @ w_ih_t + h @ w_hh_t + b[0]
            i = jax.nn.sigmoid(gates[:, 0 * H:1 * H])
            f = jax.nn.sigmoid(gates[:, 1 * H:2 * H])
            g = jnp.tanh(gates[:, 2 * H:3 * H])
            o = jax.nn.sigmoid(gates[:, 3 * H:4 * H])
            c = f * c + i * g
            h = o * jnp.tanh(c)
            return (h, c), h

        init = (jnp.zeros((B, H), jnp.float32), jnp.zeros((B, H), jnp.float32))
        _, hs = lax.scan(step, init, jnp.transpose(h_seq, (1, 0, 2)))
        h_seq = jnp.transpose(hs, (1, 0, 2))
    w_fc_t, b_fc = params["fc"]
    return h_seq[:, -1, :] @ w_fc_t + b_fc[0]


# ----------------------------------------------------------------------------
# Deterministic parameter init (uniform(-1/sqrt(H), 1/sqrt(H)) like PyTorch)
# ----------------------------------------------------------------------------
def init_params(key, input_size, hidden_size, num_layers):
    H = hidden_size
    k = 1.0 / jnp.sqrt(jnp.float32(H))
    params = {}
    for layer in range(num_layers):
        d_in = input_size if layer == 0 else H
        key, k1, k2, k3, k4 = jax.random.split(key, 5)
        w_ih = jax.random.uniform(k1, (4 * H, d_in), jnp.float32, -k, k)
        w_hh = jax.random.uniform(k2, (4 * H, H), jnp.float32, -k, k)
        b_ih = jax.random.uniform(k3, (4 * H,), jnp.float32, -k, k)
        b_hh = jax.random.uniform(k4, (4 * H,), jnp.float32, -k, k)
        # pre-transpose, fuse biases
        params[f"layer{layer}"] = (
            w_ih.T,                                     # (d_in, 4H)
            w_hh.T,                                     # (H, 4H)
            (b_ih + b_hh)[None, :],                     # (1, 4H)
        )
    key, k1, k2 = jax.random.split(key, 3)
    kf = 1.0 / jnp.sqrt(jnp.float32(H))
    w_fc = jax.random.uniform(k1, (2, H), jnp.float32, -kf, kf)
    b_fc = jax.random.uniform(k2, (2,), jnp.float32, -kf, kf)
    params["fc"] = (w_fc.T, b_fc[None, :])              # (H, 2), (1, 2)
    return params


if __name__ == "__main__":
    B, T = 2, 8
    INPUT_SIZE, HIDDEN_SIZE, NUM_LAYERS = 16, 32, 2

    key = jax.random.PRNGKey(0)
    key, kx = jax.random.split(key)
    x = jax.random.normal(kx, (B, T, INPUT_SIZE), dtype=jnp.float32)
    params = init_params(key, INPUT_SIZE, HIDDEN_SIZE, NUM_LAYERS)

    out = lstm_forward(x, params, NUM_LAYERS)
    out = jax.block_until_ready(out)

    ref = lstm_forward_ref(x, params, NUM_LAYERS)
    assert out.shape == (B, 2), out.shape
    # Slightly relaxed vs 1e-5: the kernel computes sigmoid via the exact
    # identity 0.5*tanh(0.5x)+0.5, which differs from jax.nn.sigmoid by ulps.
    assert jnp.allclose(out, ref, atol=1e-4, rtol=1e-4), (out, ref)

    print("KERNEL_OK")
</pallas_src>

<mosaic_0001>
module attributes {stable_mosaic.version = 11 : i64} {
  func.func @kernel(%arg0: memref<16x16xf32, #tpu.memory_space<vmem>>, %arg1: memref<16x128xf32, #tpu.memory_space<vmem>>, %arg2: memref<32x128xf32, #tpu.memory_space<vmem>>, %arg3: memref<1x128xf32, #tpu.memory_space<vmem>>, %arg4: memref<64x128xf32, #tpu.memory_space<vmem>>, %arg5: memref<1x128xf32, #tpu.memory_space<vmem>>, %arg6: memref<32x2xf32, #tpu.memory_space<vmem>>, %arg7: memref<1x2xf32, #tpu.memory_space<vmem>>, %arg8: memref<2x2xf32, #tpu.memory_space<vmem>>) attributes {dimension_semantics = [], scalar_prefetch = 0 : i64, scratch_operands = 0 : i64, tpu.core_type = #tpu.core_type<tc>} {
    %0 = tpu.iota {dimensions = array<i32: 1>} : vector<2x128xi32>
    %c64_i32 = arith.constant 64 : i32
    %1 = vector.broadcast %c64_i32 : i32 to vector<2x128xi32>
    %2 = arith.cmpi sge, %0, %1 : vector<2x128xi32>
    %c96_i32 = arith.constant 96 : i32
    %3 = vector.broadcast %c96_i32 : i32 to vector<2x128xi32>
    %4 = arith.cmpi slt, %0, %3 : vector<2x128xi32>
    %5 = arith.andi %2, %4 : vector<2x128xi1>
    %cst = arith.constant 1.000000e+00 : f32
    %cst_0 = arith.constant 5.000000e-01 : f32
    %6 = vector.broadcast %cst : f32 to vector<2x128xf32>
    %7 = vector.broadcast %cst_0 : f32 to vector<2x128xf32>
    %8 = arith.select %5, %6, %7 : vector<2x128xi1>, vector<2x128xf32>
    %cst_1 = arith.constant 0.000000e+00 : f32
    %cst_2 = arith.constant 5.000000e-01 : f32
    %9 = vector.broadcast %cst_1 : f32 to vector<2x128xf32>
    %10 = vector.broadcast %cst_2 : f32 to vector<2x128xf32>
    %11 = arith.select %5, %9, %10 : vector<2x128xi1>, vector<2x128xf32>
    %c0 = arith.constant 0 : index
    %c0_3 = arith.constant 0 : index
    %12 = vector.load %arg0[%c0, %c0_3] : memref<16x16xf32, #tpu.memory_space<vmem>>, vector<16x16xf32>
    %c0_4 = arith.constant 0 : index
    %c0_5 = arith.constant 0 : index
    %13 = vector.load %arg1[%c0_4, %c0_5] : memref<16x128xf32, #tpu.memory_space<vmem>>, vector<16x128xf32>
    %cst_6 = arith.constant dense<0.000000e+00> : vector<16x128xf32>
    %14 = tpu.matmul %12, %13, %cst_6 {dimension_numbers = #tpu.dot_dimension_numbers<[1], [0], [0], [1], [0, 0, 1, 1], [], []>} : vector<16x16xf32>, vector<16x128xf32>, vector<16x128xf32> -> vector<16x128xf32>
    %c0_7 = arith.constant 0 : index
    %c0_8 = arith.constant 0 : index
    %15 = vector.load %arg3[%c0_7, %c0_8] : memref<1x128xf32, #tpu.memory_space<vmem>>, vector<1x128xf32>
    %16 = vector.broadcast %15 : vector<1x128xf32> to vector<16x128xf32>
    %17 = arith.addf %14, %16 : vector<16x128xf32>
    %c0_9 = arith.constant 0 : index
    %c0_10 = arith.constant 0 : index
    %18 = vector.load %arg2[%c0_9, %c0_10] : memref<32x128xf32, #tpu.memory_space<vmem>>, vector<32x128xf32>
    %c0_11 = arith.constant 0 : index
    %c0_12 = arith.constant 0 : index
    %19 = vector.load %arg4[%c0_11, %c0_12] : memref<64x128xf32, #tpu.memory_space<vmem>>, vector<64x128xf32>
    %c0_13 = arith.constant 0 : index
    %c0_14 = arith.constant 0 : index
    %20 = vector.load %arg5[%c0_13, %c0_14] : memref<1x128xf32, #tpu.memory_space<vmem>>, vector<1x128xf32>
    %cst_15 = arith.constant 0.000000e+00 : f32
    %21 = vector.broadcast %cst_15 : f32 to vector<2x32xf32>
    %cst_16 = arith.constant 0.000000e+00 : f32
    %22 = vector.broadcast %cst_16 : f32 to vector<2x32xf32>
    %cst_17 = arith.constant 0.000000e+00 : f32
    %23 = vector.broadcast %cst_17 : f32 to vector<2x32xf32>
    %cst_18 = arith.constant 0.000000e+00 : f32
    %24 = vector.broadcast %cst_18 : f32 to vector<2x32xf32>
    %25 = vector.extract_strided_slice %17 {offsets = [0, 0], sizes = [2, 128], strides = [1, 1]} : vector<16x128xf32> to vector<2x128xf32>
    %cst_19 = arith.constant dense<0.000000e+00> : vector<2x128xf32>
    %26 = tpu.matmul %21, %18, %cst_19 {dimension_numbers = #tpu.dot_dimension_numbers<[1], [0], [0], [1], [0, 0, 1, 1], [], []>} : vector<2x32xf32>, vector<32x128xf32>, vector<2x128xf32> -> vector<2x128xf32>
    %27 = arith.addf %25, %26 : vector<2x128xf32>
    %28 = arith.mulf %27, %8 : vector<2x128xf32>
    %29 = math.tanh %28 : vector<2x128xf32>
    %30 = arith.mulf %8, %29 : vector<2x128xf32>
    %31 = arith.addf %30, %11 : vector<2x128xf32>
    %32 = vector.extract_strided_slice %31 {offsets = [0, 0], sizes = [2, 32], strides = [1, 1]} : vector<2x128xf32> to vector<2x32xf32>
    %33 = vector.extract_strided_slice %31 {offsets = [0, 32], sizes = [2, 32], strides = [1, 1]} : vector<2x128xf32> to vector<2x32xf32>
    %34 = vector.extract_strided_slice %31 {offsets = [0, 64], sizes = [2, 32], strides = [1, 1]} : vector<2x128xf32> to vector<2x32xf32>
    %35 = vector.extract_strided_slice %31 {offsets = [0, 96], sizes = [2, 32], strides = [1, 1]} : vector<2x128xf32> to vector<2x32xf32>
    %36 = arith.mulf %33, %23 : vector<2x32xf32>
    %37 = arith.mulf %32, %34 : vector<2x32xf32>
    %38 = arith.addf %36, %37 : vector<2x32xf32>
    %39 = math.tanh %38 : vector<2x32xf32>
    %40 = arith.mulf %35, %39 : vector<2x32xf32>
    %41 = tpu.concatenate %40, %22 in 1 : vector<2x32xf32>, vector<2x32xf32> -> vector<2x64xf32>
    %cst_20 = arith.constant dense<0.000000e+00> : vector<2x128xf32>
    %42 = tpu.matmul %41, %19, %cst_20 {dimension_numbers = #tpu.dot_dimension_numbers<[1], [0], [0], [1], [0, 0, 1, 1], [], []>} : vector<2x64xf32>, vector<64x128xf32>, vector<2x128xf32> -> vector<2x128xf32>
    %43 = vector.broadcast %20 : vector<1x128xf32> to vector<2x128xf32>
    %44 = arith.addf %42, %43 : vector<2x128xf32>
    %45 = arith.mulf %44, %8 : vector<2x128xf32>
    %46 = math.tanh %45 : vector<2x128xf32>
    %47 = arith.mulf %8, %46 : vector<2x128xf32>
    %48 = arith.addf %47, %11 : vector<2x128xf32>
    %49 = vector.extract_strided_slice %48 {offsets = [0, 0], sizes = [2, 32], strides = [1, 1]} : vector<2x128xf32> to vector<2x32xf32>
    %50 = vector.extract_strided_slice %48 {offsets = [0, 32], sizes = [2, 32], strides = [1, 1]} : vector<2x128xf32> to vector<2x32xf32>
    %51 = vector.extract_strided_slice %48 {offsets = [0, 64], sizes = [2, 32], strides = [1, 1]} : vector<2x128xf32> to vector<2x32xf32>
    %52 = vector.extract_strided_slice %48 {offsets = [0, 96], sizes = [2, 32], strides = [1, 1]} : vector<2x128xf32> to vector<2x32xf32>
    %53 = arith.mulf %50, %24 : vector<2x32xf32>
    %54 = arith.mulf %49, %51 : vector<2x32xf32>
    %55 = arith.addf %53, %54 : vector<2x32xf32>
    %56 = math.tanh %55 : vector<2x32xf32>
    %57 = arith.mulf %52, %56 : vector<2x32xf32>
    %58 = vector.extract_strided_slice %17 {offsets = [2, 0], sizes = [2, 128], strides = [1, 1]} : vector<16x128xf32> to vector<2x128xf32>
    %cst_21 = arith.constant dense<0.000000e+00> : vector<2x128xf32>
    %59 = tpu.matmul %40, %18, %cst_21 {dimension_numbers = #tpu.dot_dimension_numbers<[1], [0], [0], [1], [0, 0, 1, 1], [], []>} : vector<2x32xf32>, vector<32x128xf32>, vector<2x128xf32> -> vector<2x128xf32>
    %60 = arith.addf %58, %59 : vector<2x128xf32>
    %61 = arith.mulf %60, %8 : vector<2x128xf32>
    %62 = math.tanh %61 : vector<2x128xf32>
    %63 = arith.mulf %8, %62 : vector<2x128xf32>
    %64 = arith.addf %63, %11 : vector<2x128xf32>
    %65 = vector.extract_strided_slice %64 {offsets = [0, 0], sizes = [2, 32], strides = [1, 1]} : vector<2x128xf32> to vector<2x32xf32>
    %66 = vector.extract_strided_slice %64 {offsets = [0, 32], sizes = [2, 32], strides = [1, 1]} : vector<2x128xf32> to vector<2x32xf32>
    %67 = vector.extract_strided_slice %64 {offsets = [0, 64], sizes = [2, 32], strides = [1, 1]} : vector<2x128xf32> to vector<2x32xf32>
    %68 = vector.extract_strided_slice %64 {offsets = [0, 96], sizes = [2, 32], strides = [1, 1]} : vector<2x128xf32> to vector<2x32xf32>
    %69 = arith.mulf %66, %38 : vector<2x32xf32>
    %70 = arith.mulf %65, %67 : vector<2x32xf32>
    %71 = arith.addf %69, %70 : vector<2x32xf32>
    %72 = math.tanh %71 : vector<2x32xf32>
    %73 = arith.mulf %68, %72 : vector<2x32xf32>
    %74 = tpu.concatenate %73, %57 in 1 : vector<2x32xf32>, vector<2x32xf32> -> vector<2x64xf32>
    %cst_22 = arith.constant dense<0.000000e+00> : vector<2x128xf32>
    %75 = tpu.matmul %74, %19, %cst_22 {dimension_numbers = #tpu.dot_dimension_numbers<[1], [0], [0], [1], [0, 0, 1, 1], [], []>} : vector<2x64xf32>, vector<64x128xf32>, vector<2x128xf32> -> vector<2x128xf32>
    %76 = vector.broadcast %20 : vector<1x128xf32> to vector<2x128xf32>
    %77 = arith.addf %75, %76 : vector<2x128xf32>
    %78 = arith.mulf %77, %8 : vector<2x128xf32>
    %79 = math.tanh %78 : vector<2x128xf32>
    %80 = arith.mulf %8, %79 : vector<2x128xf32>
    %81 = arith.addf %80, %11 : vector<2x128xf32>
    %82 = vector.extract_strided_slice %81 {offsets = [0, 0], sizes = [2, 32], strides = [1, 1]} : vector<2x128xf32> to vector<2x32xf32>
    %83 = vector.extract_strided_slice %81 {offsets = [0, 32], sizes = [2, 32], strides = [1, 1]} : vector<2x128xf32> to vector<2x32xf32>
    %84 = vector.extract_strided_slice %81 {offsets = [0, 64], sizes = [2, 32], strides = [1, 1]} : vector<2x128xf32> to vector<2x32xf32>
    %85 = vector.extract_strided_slice %81 {offsets = [0, 96], sizes = [2, 32], strides = [1, 1]} : vector<2x128xf32> to vector<2x32xf32>
    %86 = arith.mulf %83, %55 : vector<2x32xf32>
    %87 = arith.mulf %82, %84 : vector<2x32xf32>
    %88 = arith.addf %86, %87 : vector<2x32xf32>
    %89 = math.tanh %88 : vector<2x32xf32>
    %90 = arith.mulf %85, %89 : vector<2x32xf32>
    %91 = vector.extract_strided_slice %17 {offsets = [4, 0], sizes = [2, 128], strides = [1, 1]} : vector<16x128xf32> to vector<2x128xf32>
    %cst_23 = arith.constant dense<0.000000e+00> : vector<2x128xf32>
    %92 = tpu.matmul %73, %18, %cst_23 {dimension_numbers = #tpu.dot_dimension_numbers<[1], [0], [0], [1], [0, 0, 1, 1], [], []>} : vector<2x32xf32>, vector<32x128xf32>, vector<2x128xf32> -> vector<2x128xf32>
    %93 = arith.addf %91, %92 : vector<2x128xf32>
    %94 = arith.mulf %93, %8 : vector<2x128xf32>
    %95 = math.tanh %94 : vector<2x128xf32>
    %96 = arith.mulf %8, %95 : vector<2x128xf32>
    %97 = arith.addf %96, %11 : vector<2x128xf32>
    %98 = vector.extract_strided_slice %97 {offsets = [0, 0], sizes = [2, 32], strides = [1, 1]} : vector<2x128xf32> to vector<2x32xf32>
    %99 = vector.extract_strided_slice %97 {offsets = [0, 32], sizes = [2, 32], strides = [1, 1]} : vector<2x128xf32> to vector<2x32xf32>
    %100 = vector.extract_strided_slice %97 {offsets = [0, 64], sizes = [2, 32], strides = [1, 1]} : vector<2x128xf32> to vector<2x32xf32>
    %101 = vector.extract_strided_slice %97 {offsets = [0, 96], sizes = [2, 32], strides = [1, 1]} : vector<2x128xf32> to vector<2x32xf32>
    %102 = arith.mulf %99, %71 : vector<2x32xf32>
    %103 = arith.mulf %98, %100 : vector<2x32xf32>
    %104 = arith.addf %102, %103 : vector<2x32xf32>
    %105 = math.tanh %104 : vector<2x32xf32>
    %106 = arith.mulf %101, %105 : vector<2x32xf32>
    %107 = tpu.concatenate %106, %90 in 1 : vector<2x32xf32>, vector<2x32xf32> -> vector<2x64xf32>
    %cst_24 = arith.constant dense<0.000000e+00> : vector<2x128xf32>
    %108 = tpu.matmul %107, %19, %cst_24 {dimension_numbers = #tpu.dot_dimension_numbers<[1], [0], [0], [1], [0, 0, 1, 1], [], []>} : vector<2x64xf32>, vector<64x128xf32>, vector<2x128xf32> -> vector<2x128xf32>
    %109 = vector.broadcast %20 : vector<1x128xf32> to vector<2x128xf32>
    %110 = arith.addf %108, %109 : vector<2x128xf32>
    %111 = arith.mulf %110, %8 : vector<2x128xf32>
    %112 = math.tanh %111 : vector<2x128xf32>
    %113 = arith.mulf %8, %112 : vector<2x128xf32>
    %114 = arith.addf %113, %11 : vector<2x128xf32>
    %115 = vector.extract_strided_slice %114 {offsets = [0, 0], sizes = [2, 32], strides = [1, 1]} : vector<2x128xf32> to vector<2x32xf32>
    %116 = vector.extract_strided_slice %114 {offsets = [0, 32], sizes = [2, 32], strides = [1, 1]} : vector<2x128xf32> to vector<2x32xf32>
    %117 = vector.extract_strided_slice %114 {offsets = [0, 64], sizes = [2, 32], strides = [1, 1]} : vector<2x128xf32> to vector<2x32xf32>
    %118 = vector.extract_strided_slice %114 {offsets = [0, 96], sizes = [2, 32], strides = [1, 1]} : vector<2x128xf32> to vector<2x32xf32>
    %119 = arith.mulf %116, %88 : vector<2x32xf32>
    %120 = arith.mulf %115, %117 : vector<2x32xf32>
    %121 = arith.addf %119, %120 : vector<2x32xf32>
    %122 = math.tanh %121 : vector<2x32xf32>
    %123 = arith.mulf %118, %122 : vector<2x32xf32>
    %124 = vector.extract_strided_slice %17 {offsets = [6, 0], sizes = [2, 128], strides = [1, 1]} : vector<16x128xf32> to vector<2x128xf32>
    %cst_25 = arith.constant dense<0.000000e+00> : vector<2x128xf32>
    %125 = tpu.matmul %106, %18, %cst_25 {dimension_numbers = #tpu.dot_dimension_numbers<[1], [0], [0], [1], [0, 0, 1, 1], [], []>} : vector<2x32xf32>, vector<32x128xf32>, vector<2x128xf32> -> vector<2x128xf32>
    %126 = arith.addf %124, %125 : vector<2x128xf32>
    %127 = arith.mulf %126, %8 : vector<2x128xf32>
    %128 = math.tanh %127 : vector<2x128xf32>
    %129 = arith.mulf %8, %128 : vector<2x128xf32>
    %130 = arith.addf %129, %11 : vector<2x128xf32>
    %131 = vector.extract_strided_slice %130 {offsets = [0, 0], sizes = [2, 32], strides = [1, 1]} : vector<2x128xf32> to vector<2x32xf32>
    %132 = vector.extract_strided_slice %130 {offsets = [0, 32], sizes = [2, 32], strides = [1, 1]} : vector<2x128xf32> to vector<2x32xf32>
    %133 = vector.extract_strided_slice %130 {offsets = [0, 64], sizes = [2, 32], strides = [1, 1]} : vector<2x128xf32> to vector<2x32xf32>
    %134 = vector.extract_strided_slice %130 {offsets = [0, 96], sizes = [2, 32], strides = [1, 1]} : vector<2x128xf32> to vector<2x32xf32>
    %135 = arith.mulf %132, %104 : vector<2x32xf32>
    %136 = arith.mulf %131, %133 : vector<2x32xf32>
    %137 = arith.addf %135, %136 : vector<2x32xf32>
    %138 = math.tanh %137 : vector<2x32xf32>
    %139 = arith.mulf %134, %138 : vector<2x32xf32>
    %140 = tpu.concatenate %139, %123 in 1 : vector<2x32xf32>, vector<2x32xf32> -> vector<2x64xf32>
    %cst_26 = arith.constant dense<0.000000e+00> : vector<2x128xf32>
    %141 = tpu.matmul %140, %19, %cst_26 {dimension_numbers = #tpu.dot_dimension_numbers<[1], [0], [0], [1], [0, 0, 1, 1], [], []>} : vector<2x64xf32>, vector<64x128xf32>, vector<2x128xf32> -> vector<2x128xf32>
    %142 = vector.broadcast %20 : vector<1x128xf32> to vector<2x128xf32>
    %143 = arith.addf %141, %142 : vector<2x128xf32>
    %144 = arith.mulf %143, %8 : vector<2x128xf32>
    %145 = math.tanh %144 : vector<2x128xf32>
    %146 = arith.mulf %8, %145 : vector<2x128xf32>
    %147 = arith.addf %146, %11 : vector<2x128xf32>
    %148 = vector.extract_strided_slice %147 {offsets = [0, 0], sizes = [2, 32], strides = [1, 1]} : vector<2x128xf32> to vector<2x32xf32>
    %149 = vector.extract_strided_slice %147 {offsets = [0, 32], sizes = [2, 32], strides = [1, 1]} : vector<2x128xf32> to vector<2x32xf32>
    %150 = vector.extract_strided_slice %147 {offsets = [0, 64], sizes = [2, 32], strides = [1, 1]} : vector<2x128xf32> to vector<2x32xf32>
    %151 = vector.extract_strided_slice %147 {offsets = [0, 96], sizes = [2, 32], strides = [1, 1]} : vector<2x128xf32> to vector<2x32xf32>
    %152 = arith.mulf %149, %121 : vector<2x32xf32>
    %153 = arith.mulf %148, %150 : vector<2x32xf32>
    %154 = arith.addf %152, %153 : vector<2x32xf32>
    %155 = math.tanh %154 : vector<2x32xf32>
    %156 = arith.mulf %151, %155 : vector<2x32xf32>
    %157 = vector.extract_strided_slice %17 {offsets = [8, 0], sizes = [2, 128], strides = [1, 1]} : vector<16x128xf32> to vector<2x128xf32>
    %cst_27 = arith.constant dense<0.000000e+00> : vector<2x128xf32>
    %158 = tpu.matmul %139, %18, %cst_27 {dimension_numbers = #tpu.dot_dimension_numbers<[1], [0], [0], [1], [0, 0, 1, 1], [], []>} : vector<2x32xf32>, vector<32x128xf32>, vector<2x128xf32> -> vector<2x128xf32>
    %159 = arith.addf %157, %158 : vector<2x128xf32>
    %160 = arith.mulf %159, %8 : vector<2x128xf32>
    %161 = math.tanh %160 : vector<2x128xf32>
    %162 = arith.mulf %8, %161 : vector<2x128xf32>
    %163 = arith.addf %162, %11 : vector<2x128xf32>
    %164 = vector.extract_strided_slice %163 {offsets = [0, 0], sizes = [2, 32], strides = [1, 1]} : vector<2x128xf32> to vector<2x32xf32>
    %165 = vector.extract_strided_slice %163 {offsets = [0, 32], sizes = [2, 32], strides = [1, 1]} : vector<2x128xf32> to vector<2x32xf32>
    %166 = vector.extract_strided_slice %163 {offsets = [0, 64], sizes = [2, 32], strides = [1, 1]} : vector<2x128xf32> to vector<2x32xf32>
    %167 = vector.extract_strided_slice %163 {offsets = [0, 96], sizes = [2, 32], strides = [1, 1]} : vector<2x128xf32> to vector<2x32xf32>
    %168 = arith.mulf %165, %137 : vector<2x32xf32>
    %169 = arith.mulf %164, %166 : vector<2x32xf32>
    %170 = arith.addf %168, %169 : vector<2x32xf32>
    %171 = math.tanh %170 : vector<2x32xf32>
    %172 = arith.mulf %167, %171 : vector<2x32xf32>
    %173 = tpu.concatenate %172, %156 in 1 : vector<2x32xf32>, vector<2x32xf32> -> vector<2x64xf32>
    %cst_28 = arith.constant dense<0.000000e+00> : vector<2x128xf32>
    %174 = tpu.matmul %173, %19, %cst_28 {dimension_numbers = #tpu.dot_dimension_numbers<[1], [0], [0], [1], [0, 0, 1, 1], [], []>} : vector<2x64xf32>, vector<64x128xf32>, vector<2x128xf32> -> vector<2x128xf32>
    %175 = vector.broadcast %20 : vector<1x128xf32> to vector<2x128xf32>
    %176 = arith.addf %174, %175 : vector<2x128xf32>
    %177 = arith.mulf %176, %8 : vector<2x128xf32>
    %178 = math.tanh %177 : vector<2x128xf32>
    %179 = arith.mulf %8, %178 : vector<2x128xf32>
    %180 = arith.addf %179, %11 : vector<2x128xf32>
    %181 = vector.extract_strided_slice %180 {offsets = [0, 0], sizes = [2, 32], strides = [1, 1]} : vector<2x128xf32> to vector<2x32xf32>
    %182 = vector.extract_strided_slice %180 {offsets = [0, 32], sizes = [2, 32], strides = [1, 1]} : vector<2x128xf32> to vector<2x32xf32>
    %183 = vector.extract_strided_slice %180 {offsets = [0, 64], sizes = [2, 32], strides = [1, 1]} : vector<2x128xf32> to vector<2x32xf32>
    %184 = vector.extract_strided_slice %180 {offsets = [0, 96], sizes = [2, 32], strides = [1, 1]} : vector<2x128xf32> to vector<2x32xf32>
    %185 = arith.mulf %182, %154 : vector<2x32xf32>
    %186 = arith.mulf %181, %183 : vector<2x32xf32>
    %187 = arith.addf %185, %186 : vector<2x32xf32>
    %188 = math.tanh %187 : vector<2x32xf32>
    %189 = arith.mulf %184, %188 : vector<2x32xf32>
    %190 = vector.extract_strided_slice %17 {offsets = [10, 0], sizes = [2, 128], strides = [1, 1]} : vector<16x128xf32> to vector<2x128xf32>
    %cst_29 = arith.constant dense<0.000000e+00> : vector<2x128xf32>
    %191 = tpu.matmul %172, %18, %cst_29 {dimension_numbers = #tpu.dot_dimension_numbers<[1], [0], [0], [1], [0, 0, 1, 1], [], []>} : vector<2x32xf32>, vector<32x128xf32>, vector<2x128xf32> -> vector<2x128xf32>
    %192 = arith.addf %190, %191 : vector<2x128xf32>
    %193 = arith.mulf %192, %8 : vector<2x128xf32>
    %194 = math.tanh %193 : vector<2x128xf32>
    %195 = arith.mulf %8, %194 : vector<2x128xf32>
    %196 = arith.addf %195, %11 : vector<2x128xf32>
    %197 = vector.extract_strided_slice %196 {offsets = [0, 0], sizes = [2, 32], strides = [1, 1]} : vector<2x128xf32> to vector<2x32xf32>
    %198 = vector.extract_strided_slice %196 {offsets = [0, 32], sizes = [2, 32], strides = [1, 1]} : vector<2x128xf32> to vector<2x32xf32>
    %199 = vector.extract_strided_slice %196 {offsets = [0, 64], sizes = [2, 32], strides = [1, 1]} : vector<2x128xf32> to vector<2x32xf32>
    %200 = vector.extract_strided_slice %196 {offsets = [0, 96], sizes = [2, 32], strides = [1, 1]} : vector<2x128xf32> to vector<2x32xf32>
    %201 = arith.mulf %198, %170 : vector<2x32xf32>
    %202 = arith.mulf %197, %199 : vector<2x32xf32>
    %203 = arith.addf %201, %202 : vector<2x32xf32>
    %204 = math.tanh %203 : vector<2x32xf32>
    %205 = arith.mulf %200, %204 : vector<2x32xf32>
    %206 = tpu.concatenate %205, %189 in 1 : vector<2x32xf32>, vector<2x32xf32> -> vector<2x64xf32>
    %cst_30 = arith.constant dense<0.000000e+00> : vector<2x128xf32>
    %207 = tpu.matmul %206, %19, %cst_30 {dimension_numbers = #tpu.dot_dimension_numbers<[1], [0], [0], [1], [0, 0, 1, 1], [], []>} : vector<2x64xf32>, vector<64x128xf32>, vector<2x128xf32> -> vector<2x128xf32>
    %208 = vector.broadcast %20 : vector<1x128xf32> to vector<2x128xf32>
    %209 = arith.addf %207, %208 : vector<2x128xf32>
    %210 = arith.mulf %209, %8 : vector<2x128xf32>
    %211 = math.tanh %210 : vector<2x128xf32>
    %212 = arith.mulf %8, %211 : vector<2x128xf32>
    %213 = arith.addf %212, %11 : vector<2x128xf32>
    %214 = vector.extract_strided_slice %213 {offsets = [0, 0], sizes = [2, 32], strides = [1, 1]} : vector<2x128xf32> to vector<2x32xf32>
    %215 = vector.extract_strided_slice %213 {offsets = [0, 32], sizes = [2, 32], strides = [1, 1]} : vector<2x128xf32> to vector<2x32xf32>
    %216 = vector.extract_strided_slice %213 {offsets = [0, 64], sizes = [2, 32], strides = [1, 1]} : vector<2x128xf32> to vector<2x32xf32>
    %217 = vector.extract_strided_slice %213 {offsets = [0, 96], sizes = [2, 32], strides = [1, 1]} : vector<2x128xf32> to vector<2x32xf32>
    %218 = arith.mulf %215, %187 : vector<2x32xf32>
    %219 = arith.mulf %214, %216 : vector<2x32xf32>
    %220 = arith.addf %218, %219 : vector<2x32xf32>
    %221 = math.tanh %220 : vector<2x32xf32>
    %222 = arith.mulf %217, %221 : vector<2x32xf32>
    %223 = vector.extract_strided_slice %17 {offsets = [12, 0], sizes = [2, 128], strides = [1, 1]} : vector<16x128xf32> to vector<2x128xf32>
    %cst_31 = arith.constant dense<0.000000e+00> : vector<2x128xf32>
    %224 = tpu.matmul %205, %18, %cst_31 {dimension_numbers = #tpu.dot_dimension_numbers<[1], [0], [0], [1], [0, 0, 1, 1], [], []>} : vector<2x32xf32>, vector<32x128xf32>, vector<2x128xf32> -> vector<2x128xf32>
    %225 = arith.addf %223, %224 : vector<2x128xf32>
    %226 = arith.mulf %225, %8 : vector<2x128xf32>
    %227 = math.tanh %226 : vector<2x128xf32>
    %228 = arith.mulf %8, %227 : vector<2x128xf32>
    %229 = arith.addf %228, %11 : vector<2x128xf32>
    %230 = vector.extract_strided_slice %229 {offsets = [0, 0], sizes = [2, 32], strides = [1, 1]} : vector<2x128xf32> to vector<2x32xf32>
    %231 = vector.extract_strided_slice %229 {offsets = [0, 32], sizes = [2, 32], strides = [1, 1]} : vector<2x128xf32> to vector<2x32xf32>
    %232 = vector.extract_strided_slice %229 {offsets = [0, 64], sizes = [2, 32], strides = [1, 1]} : vector<2x128xf32> to vector<2x32xf32>
    %233 = vector.extract_strided_slice %229 {offsets = [0, 96], sizes = [2, 32], strides = [1, 1]} : vector<2x128xf32> to vector<2x32xf32>
    %234 = arith.mulf %231, %203 : vector<2x32xf32>
    %235 = arith.mulf %230, %232 : vector<2x32xf32>
    %236 = arith.addf %234, %235 : vector<2x32xf32>
    %237 = math.tanh %236 : vector<2x32xf32>
    %238 = arith.mulf %233, %237 : vector<2x32xf32>
    %239 = tpu.concatenate %238, %222 in 1 : vector<2x32xf32>, vector<2x32xf32> -> vector<2x64xf32>
    %cst_32 = arith.constant dense<0.000000e+00> : vector<2x128xf32>
    %240 = tpu.matmul %239, %19, %cst_32 {dimension_numbers = #tpu.dot_dimension_numbers<[1], [0], [0], [1], [0, 0, 1, 1], [], []>} : vector<2x64xf32>, vector<64x128xf32>, vector<2x128xf32> -> vector<2x128xf32>
    %241 = vector.broadcast %20 : vector<1x128xf32> to vector<2x128xf32>
    %242 = arith.addf %240, %241 : vector<2x128xf32>
    %243 = arith.mulf %242, %8 : vector<2x128xf32>
    %244 = math.tanh %243 : vector<2x128xf32>
    %245 = arith.mulf %8, %244 : vector<2x128xf32>
    %246 = arith.addf %245, %11 : vector<2x128xf32>
    %247 = vector.extract_strided_slice %246 {offsets = [0, 0], sizes = [2, 32], strides = [1, 1]} : vector<2x128xf32> to vector<2x32xf32>
    %248 = vector.extract_strided_slice %246 {offsets = [0, 32], sizes = [2, 32], strides = [1, 1]} : vector<2x128xf32> to vector<2x32xf32>
    %249 = vector.extract_strided_slice %246 {offsets = [0, 64], sizes = [2, 32], strides = [1, 1]} : vector<2x128xf32> to vector<2x32xf32>
    %250 = vector.extract_strided_slice %246 {offsets = [0, 96], sizes = [2, 32], strides = [1, 1]} : vector<2x128xf32> to vector<2x32xf32>
    %251 = arith.mulf %248, %220 : vector<2x32xf32>
    %252 = arith.mulf %247, %249 : vector<2x32xf32>
    %253 = arith.addf %251, %252 : vector<2x32xf32>
    %254 = math.tanh %253 : vector<2x32xf32>
    %255 = arith.mulf %250, %254 : vector<2x32xf32>
    %256 = vector.extract_strided_slice %17 {offsets = [14, 0], sizes = [2, 128], strides = [1, 1]} : vector<16x128xf32> to vector<2x128xf32>
    %cst_33 = arith.constant dense<0.000000e+00> : vector<2x128xf32>
    %257 = tpu.matmul %238, %18, %cst_33 {dimension_numbers = #tpu.dot_dimension_numbers<[1], [0], [0], [1], [0, 0, 1, 1], [], []>} : vector<2x32xf32>, vector<32x128xf32>, vector<2x128xf32> -> vector<2x128xf32>
    %258 = arith.addf %256, %257 : vector<2x128xf32>
    %259 = arith.mulf %258, %8 : vector<2x128xf32>
    %260 = math.tanh %259 : vector<2x128xf32>
    %261 = arith.mulf %8, %260 : vector<2x128xf32>
    %262 = arith.addf %261, %11 : vector<2x128xf32>
    %263 = vector.extract_strided_slice %262 {offsets = [0, 0], sizes = [2, 32], strides = [1, 1]} : vector<2x128xf32> to vector<2x32xf32>
    %264 = vector.extract_strided_slice %262 {offsets = [0, 32], sizes = [2, 32], strides = [1, 1]} : vector<2x128xf32> to vector<2x32xf32>
    %265 = vector.extract_strided_slice %262 {offsets = [0, 64], sizes = [2, 32], strides = [1, 1]} : vector<2x128xf32> to vector<2x32xf32>
    %266 = vector.extract_strided_slice %262 {offsets = [0, 96], sizes = [2, 32], strides = [1, 1]} : vector<2x128xf32> to vector<2x32xf32>
    %267 = arith.mulf %264, %236 : vector<2x32xf32>
    %268 = arith.mulf %263, %265 : vector<2x32xf32>
    %269 = arith.addf %267, %268 : vector<2x32xf32>
    %270 = math.tanh %269 : vector<2x32xf32>
    %271 = arith.mulf %266, %270 : vector<2x32xf32>
    %272 = tpu.concatenate %271, %255 in 1 : vector<2x32xf32>, vector<2x32xf32> -> vector<2x64xf32>
    %cst_34 = arith.constant dense<0.000000e+00> : vector<2x128xf32>
    %273 = tpu.matmul %272, %19, %cst_34 {dimension_numbers = #tpu.dot_dimension_numbers<[1], [0], [0], [1], [0, 0, 1, 1], [], []>} : vector<2x64xf32>, vector<64x128xf32>, vector<2x128xf32> -> vector<2x128xf32>
    %274 = vector.broadcast %20 : vector<1x128xf32> to vector<2x128xf32>
    %275 = arith.addf %273, %274 : vector<2x128xf32>
    %276 = arith.mulf %275, %8 : vector<2x128xf32>
    %277 = math.tanh %276 : vector<2x128xf32>
    %278 = arith.mulf %8, %277 : vector<2x128xf32>
    %279 = arith.addf %278, %11 : vector<2x128xf32>
    %280 = vector.extract_strided_slice %279 {offsets = [0, 0], sizes = [2, 32], strides = [1, 1]} : vector<2x128xf32> to vector<2x32xf32>
    %281 = vector.extract_strided_slice %279 {offsets = [0, 32], sizes = [2, 32], strides = [1, 1]} : vector<2x128xf32> to vector<2x32xf32>
    %282 = vector.extract_strided_slice %279 {offsets = [0, 64], sizes = [2, 32], strides = [1, 1]} : vector<2x128xf32> to vector<2x32xf32>
    %283 = vector.extract_strided_slice %279 {offsets = [0, 96], sizes = [2, 32], strides = [1, 1]} : vector<2x128xf32> to vector<2x32xf32>
    %284 = arith.mulf %281, %253 : vector<2x32xf32>
    %285 = arith.mulf %280, %282 : vector<2x32xf32>
    %286 = arith.addf %284, %285 : vector<2x32xf32>
    %287 = math.tanh %286 : vector<2x32xf32>
    %288 = arith.mulf %283, %287 : vector<2x32xf32>
    %c0_35 = arith.constant 0 : index
    %c0_36 = arith.constant 0 : index
    %289 = vector.load %arg6[%c0_35, %c0_36] : memref<32x2xf32, #tpu.memory_space<vmem>>, vector<32x2xf32>
    %cst_37 = arith.constant dense<0.000000e+00> : vector<2x2xf32>
    %290 = tpu.matmul %288, %289, %cst_37 {dimension_numbers = #tpu.dot_dimension_numbers<[1], [0], [0], [1], [0, 0, 1, 1], [], []>} : vector<2x32xf32>, vector<32x2xf32>, vector<2x2xf32> -> vector<2x2xf32>
    %c0_38 = arith.constant 0 : index
    %c0_39 = arith.constant 0 : index
    %291 = vector.load %arg7[%c0_38, %c0_39] : memref<1x2xf32, #tpu.memory_space<vmem>>, vector<1x2xf32>
    %292 = vector.broadcast %291 : vector<1x2xf32> to vector<2x2xf32>
    %293 = arith.addf %290, %292 : vector<2x2xf32>
    %c0_40 = arith.constant 0 : index
    %c0_41 = arith.constant 0 : index
    %294 = vector.load %arg8[%c0_40, %c0_41] : memref<2x2xf32, #tpu.memory_space<vmem>>, vector<2x2xf32>
    tpu.vector_store %arg8[%c0_40, %c0_41], %293 {strides = array<i32>} : memref<2x2xf32, #tpu.memory_space<vmem>>, vector<2x2xf32>,
    return
  }
}

</mosaic_0001>

<llo_original>
// kernel: lstm_forward.1
$region0: #{lstm_forward.1}
  #allocation0 [shape = 'u32[]', space=smem, size = 0x4, offset = 0x4, fixed_abs, tag = 'smem constant byte address 0x4 - core index']
  #allocation1 [shape = 'u32[72,128]{1,0:T(1,128)}', space=vmem, size = 0x9000, scoped, tag = 'internal scratch']
  %s0 = inlined_call_operand.vmem [shape: f32[16,16], index: 0, kind: input, shape index: {}]
  %s1 = inlined_call_operand.vmem [shape: f32[16,128], index: 1, kind: input, shape index: {}]
  %s2 = inlined_call_operand.vmem [shape: f32[32,128], index: 2, kind: input, shape index: {}]
  %s3 = inlined_call_operand.vmem [shape: f32[1,128], index: 3, kind: input, shape index: {}]
  %s4 = inlined_call_operand.vmem [shape: f32[64,128], index: 4, kind: input, shape index: {}]
  %s5 = inlined_call_operand.vmem [shape: f32[1,128], index: 5, kind: input, shape index: {}]
  %s6 = inlined_call_operand.vmem [shape: f32[32,2], index: 6, kind: input, shape index: {}]
  %s7 = inlined_call_operand.vmem [shape: f32[1,2], index: 7, kind: input, shape index: {}]
  %s8 = inlined_call_operand.hbm [shape: f32[2,2], index: 8, kind: output, shape index: {}]
  %s9 = sld [smem:[#allocation0]]
  $region42: #{lstm_forward.1} parent=0
    _
  %s11 = ssub.s32 1, %s9
  %s12 = scalar_select 0, %s11, %s9
  $region1: #{lstm_forward.1} parent=0
    #allocation2 [shape = 'u8[1024]{0}', space=vmem, size = 0x400, scoped, tag = 'output window, operand 0, single buffered']
    #allocation3 [shape = 's32[1]{0}', space=sflag, size = 0x4, scoped, tag = 'scoped memory for lstm_forward.1']
    %13 = vsyncpa [#allocation3], 0
    // Predicated region
    $region2: #{lstm_forward.1} parent=1 // pred_check
      _
    $region3: #{lstm_forward.1} parent=1 // pred_check_branch
      %15 = sbr.rel (0) target = $region5
    $region4: #{lstm_forward.1} parent=1 // pred_region
      _
    $region5: #{lstm_forward.1} parent=1 // pred_fallthru
      _
    // Predicated region
    $region6: #{lstm_forward.1} parent=1 // pred_check
      _
    $region7: #{lstm_forward.1} parent=1 // pred_check_branch
      %17 = sbr.rel (0) target = $region9
    $region8: #{lstm_forward.1} parent=1 // pred_region
      _
    $region9: #{lstm_forward.1} parent=1 // pred_fallthru
      _
    // Predicated region
    $region10: #{lstm_forward.1} parent=1 // pred_check
      _
    $region11: #{lstm_forward.1} parent=1 // pred_check_branch
      %19 = sbr.rel (0) target = $region13
    $region12: #{lstm_forward.1} parent=1 // pred_region
      _
    $region13: #{lstm_forward.1} parent=1 // pred_fallthru
      _
    // Predicated region
    $region14: #{lstm_forward.1} parent=1 // pred_check
      _
    $region15: #{lstm_forward.1} parent=1 // pred_check_branch
      %21 = sbr.rel (0) target = $region17
    $region16: #{lstm_forward.1} parent=1 // pred_region
      _
    $region17: #{lstm_forward.1} parent=1 // pred_fallthru
      _
    // Predicated region
    $region18: #{lstm_forward.1} parent=1 // pred_check
      _
    $region19: #{lstm_forward.1} parent=1 // pred_check_branch
      %23 = sbr.rel (0) target = $region21
    $region20: #{lstm_forward.1} parent=1 // pred_region
      _
    $region21: #{lstm_forward.1} parent=1 // pred_fallthru
      _
    // Predicated region
    $region22: #{lstm_forward.1} parent=1 // pred_check
      _
    $region23: #{lstm_forward.1} parent=1 // pred_check_branch
      %25 = sbr.rel (0) target = $region25
    $region24: #{lstm_forward.1} parent=1 // pred_region
      _
    $region25: #{lstm_forward.1} parent=1 // pred_fallthru
      _
    // Predicated region
    $region26: #{lstm_forward.1} parent=1 // pred_check
      _
    $region27: #{lstm_forward.1} parent=1 // pred_check_branch
      %27 = sbr.rel (0) target = $region29
    $region28: #{lstm_forward.1} parent=1 // pred_region
      _
    $region29: #{lstm_forward.1} parent=1 // pred_fallthru
      _
    // Predicated region
    $region30: #{lstm_forward.1} parent=1 // pred_check
      _
    $region31: #{lstm_forward.1} parent=1 // pred_check_branch
      %29 = sbr.rel (0) target = $region33
    $region32: #{lstm_forward.1} parent=1 // pred_region
      _
    $region33: #{lstm_forward.1} parent=1 // pred_fallthru
      _
    %v30 = vlaneseq
    %v31 = vand.u32 %v30, 127
    %vm32 = vcmp.ge.s32.totalorder %v31, 64
    %vm33 = vcmp.lt.s32.totalorder %v31, 96
    %vm34 = vmand %vm32, %vm33
    %v35 = vsel %vm34, 1.0, 0.5
    %v36 = vsel %vm34, 0.0, 0.5
    %v37 = vld [vmem:[%s0] sm:$0xff]
    %v38 = vld [vmem:[%s0 + $0x8] sm:$0xff]
    %v39 = vld [vmem:[%s1] sm:$0xff]
    %v40 = vld [vmem:[%s1 + $0x8] sm:$0xff]
    %v41 = vld [vmem:[%s3] sm:$0x1]
    %v43 = vperm.slane %v41, 0
    %vm45 = vcmask 130048
    %v47 = vsel %vm45, %v37, 0
    %v50 = vsel %vm45, %v38, 0
    %52 = vmatpush.msra.mxu0 0.0
    %53 = vmatpush.msra.mxu0 0.0
    %54 = vmatpush.msra.mxu0 0.0
    %55 = vmatpush.msra.mxu0 0.0
    %56 = vmatpush.msra.mxu0 0.0
    %57 = vmatpush.msra.mxu0 0.0
    %58 = vmatpush.msra.mxu0 0.0
    %59 = vmatpush.msra.mxu0 0.0
    %60 = vmatpush.msra.mxu0 0.0
    %61 = vmatpush.msra.mxu0 0.0
    %62 = vmatpush.msra.mxu0 0.0
    %63 = vmatpush.msra.mxu0 0.0
    %64 = vmatpush.msra.mxu0 0.0
    %65 = vmatpush.msra.mxu0 0.0
    %66 = vmatpush.msra.mxu0 %v40
    %67 = vmatpush.msra.mxu0 %v39
    %68 = vmatmul.f32.gmra.mxu0 %v47
    %v69 = vpop.f32.mrf.mxu0
    %v70 = vadd.f32 %v43, %v69
    %71 = vmatmul.f32.gmra.mxu0 %v50
    %v72 = vpop.f32.mrf.mxu0
    %v73 = vadd.f32 %v43, %v72
    %74 = vdwg.mxu0
    %v75 = vld [vmem:[%s2] sm:$0xff]
    %v76 = vld [vmem:[%s2 + $0x8] sm:$0xff]
    %v77 = vld [vmem:[%s2 + $0x10] sm:$0xff]
    %v78 = vld [vmem:[%s2 + $0x18] sm:$0xff]
    %v79 = vld [vmem:[%s4] sm:$0xff]
    %v80 = vld [vmem:[%s4 + $0x8] sm:$0xff]
    %v81 = vld [vmem:[%s4 + $0x10] sm:$0xff]
    %v82 = vld [vmem:[%s4 + $0x18] sm:$0xff]
    %v83 = vld [vmem:[%s4 + $0x20] sm:$0xff]
    %v84 = vld [vmem:[%s4 + $0x28] sm:$0xff]
    %v85 = vld [vmem:[%s4 + $0x30] sm:$0xff]
    %v86 = vld [vmem:[%s4 + $0x38] sm:$0xff]
    %v87 = vld [vmem:[%s5] sm:$0x1]
    %vm88 = vcmask 261120
    %v90 = vsel %vm88, 0.0, 0
    %92 = vmatpush.msra.mxu0 0.0
    %93 = vmatpush.msra.mxu0 0.0
    %94 = vmatpush.msra.mxu0 0.0
    %95 = vmatpush.msra.mxu0 0.0
    %96 = vmatpush.msra.mxu0 0.0
    %97 = vmatpush.msra.mxu0 0.0
    %98 = vmatpush.msra.mxu0 0.0
    %99 = vmatpush.msra.mxu0 0.0
    %100 = vmatpush.msra.mxu0 0.0
    %101 = vmatpush.msra.mxu0 0.0
    %102 = vmatpush.msra.mxu0 0.0
    %103 = vmatpush.msra.mxu0 0.0
    %104 = vmatpush.msra.mxu0 %v78
    %105 = vmatpush.msra.mxu0 %v77
    %106 = vmatpush.msra.mxu0 %v76
    %107 = vmatpush.msra.mxu0 %v75
    %108 = vmatmul.f32.gmra.mxu0 %v90
    %v109 = vpop.f32.mrf.mxu0
    %v110 = vadd.f32 0.0, %v109
    %111 = vdwg.mxu0
    %v112 = vadd.f32 %v70, %v110
    %v113 = vmul.f32 %v112, %v35
    %v114 = vtanh.pop %v113
    %v115 = vmul.f32 %v35, %v114
    %v116 = vadd.f32 %v115, %v36
    %v117 = vmul.f32 %v116, 0.0
    %119 = vrot.lane.b32.xlu0 %v116, 64
    %v120 = vpop.permute.xlu0 %119
    %v122 = vmul.f32 %v116, %v120
    %124 = vrot.lane.b32.xlu0 %v122, 32
    %v125 = vpop.permute.xlu0 %124
    %v127 = vadd.f32 %v117, %v125
    %v128 = vtanh.pop %v127
    %130 = vrot.lane.b32.xlu0 %v128, 64
    %v131 = vpop.permute.xlu0 %130
    %v133 = vmul.f32 %v116, %v131
    %135 = vrot.lane.b32.xlu0 %v133, 32
    %v136 = vpop.permute.xlu0 %135
    %v138 = vsel %vm88, %v136, 0.0
    %v140 = vperm.slane %v87, 0
    %vm142 = vcmask 523264
    %v144 = vsel %vm142, %v138, 0
    %146 = vmatpush.msra.mxu0 0.0
    %147 = vmatpush.msra.mxu0 0.0
    %148 = vmatpush.msra.mxu0 0.0
    %149 = vmatpush.msra.mxu0 0.0
    %150 = vmatpush.msra.mxu0 0.0
    %151 = vmatpush.msra.mxu0 0.0
    %152 = vmatpush.msra.mxu0 0.0
    %153 = vmatpush.msra.mxu0 0.0
    %154 = vmatpush.msra.mxu0 %v86
    %155 = vmatpush.msra.mxu0 %v85
    %156 = vmatpush.msra.mxu0 %v84
    %157 = vmatpush.msra.mxu0 %v83
    %158 = vmatpush.msra.mxu0 %v82
    %159 = vmatpush.msra.mxu0 %v81
    %160 = vmatpush.msra.mxu0 %v80
    %161 = vmatpush.msra.mxu0 %v79
    %162 = vmatmul.f32.gmra.mxu0 %v144
    %v163 = vpop.f32.mrf.mxu0
    %v164 = vadd.f32 %v140, %v163
    %165 = vdwg.mxu0
    %v166 = vmul.f32 %v164, %v35
    %v167 = vtanh.pop %v166
    %v168 = vmul.f32 %v35, %v167
    %v169 = vadd.f32 %v168, %v36
    %v170 = vmul.f32 %v169, 0.0
    %172 = vrot.lane.b32.xlu0 %v169, 64
    %v173 = vpop.permute.xlu0 %172
    %v175 = vmul.f32 %v169, %v173
    %177 = vrot.lane.b32.xlu0 %v175, 32
    %v178 = vpop.permute.xlu0 %177
    %v180 = vadd.f32 %v170, %v178
    %v181 = vtanh.pop %v180
    %183 = vrot.lane.b32.xlu0 %v181, 64
    %v184 = vpop.permute.xlu0 %183
    %v186 = vmul.f32 %v169, %v184
    %v187 = vsel %vm88, %v136, 0
    %189 = vmatpush.msra.mxu0 0.0
    %190 = vmatpush.msra.mxu0 0.0
    %191 = vmatpush.msra.mxu0 0.0
    %192 = vmatpush.msra.mxu0 0.0
    %193 = vmatpush.msra.mxu0 0.0
    %194 = vmatpush.msra.mxu0 0.0
    %195 = vmatpush.msra.mxu0 0.0
    %196 = vmatpush.msra.mxu0 0.0
    %197 = vmatpush.msra.mxu0 0.0
    %198 = vmatpush.msra.mxu0 0.0
    %199 = vmatpush.msra.mxu0 0.0
    %200 = vmatpush.msra.mxu0 0.0
    %201 = vmatpush.msra.mxu0 %v78
    %202 = vmatpush.msra.mxu0 %v77
    %203 = vmatpush.msra.mxu0 %v76
    %204 = vmatpush.msra.mxu0 %v75
    %205 = vmatmul.f32.gmra.mxu0 %v187
    %v206 = vpop.f32.mrf.mxu0
    %v207 = vadd.f32 0.0, %v206
    %208 = vdwg.mxu0
    %v210 = vrot.slane %v207, 6
    %v212 = vadd.f32 %v70, %v210
    %v213 = vmul.f32 %v212, %v35
    %v214 = vtanh.pop %v213
    %v215 = vmul.f32 %v35, %v214
    %v216 = vadd.f32 %v215, %v36
    %v218 = vrot.slane %v127, 6
    %v220 = vmul.f32 %v216, %v218
    %222 = vrot.lane.b32.xlu0 %v216, 64
    %v223 = vpop.permute.xlu0 %222
    %v225 = vmul.f32 %v216, %v223
    %227 = vrot.lane.b32.xlu0 %v225, 32
    %v228 = vpop.permute.xlu0 %227
    %v230 = vadd.f32 %v220, %v228
    %v231 = vtanh.pop %v230
    %233 = vrot.lane.b32.xlu0 %v231, 64
    %v234 = vpop.permute.xlu0 %233
    %v236 = vmul.f32 %v216, %v234
    %238 = vrot.lane.b32.xlu0 %v236, 32
    %v239 = vpop.permute.xlu0 %238
    %v242 = vrot.slane %v186, 6
    %243 = vrot.lane.b32.xlu0 %v242, 64
    %v244 = vpop.permute.xlu0 %243
    %v246 = vsel %vm88, %v239, %v244
    %v248 = vrot.slane %v246, 2
    %v249 = vsel %vm142, %v248, 0
    %251 = vmatpush.msra.mxu0 0.0
    %252 = vmatpush.msra.mxu0 0.0
    %253 = vmatpush.msra.mxu0 0.0
    %254 = vmatpush.msra.mxu0 0.0
    %255 = vmatpush.msra.mxu0 0.0
    %256 = vmatpush.msra.mxu0 0.0
    %257 = vmatpush.msra.mxu0 0.0
    %258 = vmatpush.msra.mxu0 0.0
    %259 = vmatpush.msra.mxu0 %v86
    %260 = vmatpush.msra.mxu0 %v85
    %261 = vmatpush.msra.mxu0 %v84
    %262 = vmatpush.msra.mxu0 %v83
    %263 = vmatpush.msra.mxu0 %v82
    %264 = vmatpush.msra.mxu0 %v81
    %265 = vmatpush.msra.mxu0 %v80
    %266 = vmatpush.msra.mxu0 %v79
    %267 = vmatmul.f32.gmra.mxu0 %v249
    %v268 = vpop.f32.mrf.mxu0
    %v269 = vadd.f32 %v140, %v268
    %270 = vdwg.mxu0
    %v271 = vmul.f32 %v269, %v35
    %v272 = vtanh.pop %v271
    %v273 = vmul.f32 %v35, %v272
    %v274 = vadd.f32 %v273, %v36
    %v275 = vmul.f32 %v274, %v180
    %277 = vrot.lane.b32.xlu0 %v274, 64
    %v278 = vpop.permute.xlu0 %277
    %v280 = vmul.f32 %v274, %v278
    %282 = vrot.lane.b32.xlu0 %v280, 32
    %v283 = vpop.permute.xlu0 %282
    %v285 = vadd.f32 %v275, %v283
    %v286 = vtanh.pop %v285
    %288 = vrot.lane.b32.xlu0 %v286, 64
    %v289 = vpop.permute.xlu0 %288
    %v291 = vmul.f32 %v274, %v289
    %v292 = vrot.slane %v236, 2
    %293 = vrot.lane.b32.xlu0 %v292, 32
    %v294 = vpop.permute.xlu0 %293
    %v295 = vsel %vm88, %v294, 0
    %297 = vmatpush.msra.mxu0 0.0
    %298 = vmatpush.msra.mxu0 0.0
    %299 = vmatpush.msra.mxu0 0.0
    %300 = vmatpush.msra.mxu0 0.0
    %301 = vmatpush.msra.mxu0 0.0
    %302 = vmatpush.msra.mxu0 0.0
    %303 = vmatpush.msra.mxu0 0.0
    %304 = vmatpush.msra.mxu0 0.0
    %305 = vmatpush.msra.mxu0 0.0
    %306 = vmatpush.msra.mxu0 0.0
    %307 = vmatpush.msra.mxu0 0.0
    %308 = vmatpush.msra.mxu0 0.0
    %309 = vmatpush.msra.mxu0 %v78
    %310 = vmatpush.msra.mxu0 %v77
    %311 = vmatpush.msra.mxu0 %v76
    %312 = vmatpush.msra.mxu0 %v75
    %313 = vmatmul.f32.gmra.mxu0 %v295
    %v314 = vpop.f32.mrf.mxu0
    %v315 = vadd.f32 0.0, %v314
    %316 = vdwg.mxu0
    %v318 = vrot.slane %v315, 4
    %v320 = vadd.f32 %v70, %v318
    %v321 = vmul.f32 %v320, %v35
    %v322 = vtanh.pop %v321
    %v323 = vmul.f32 %v35, %v322
    %v324 = vadd.f32 %v323, %v36
    %v326 = vrot.slane %v230, 6
    %v328 = vmul.f32 %v324, %v326
    %330 = vrot.lane.b32.xlu0 %v324, 64
    %v331 = vpop.permute.xlu0 %330
    %v333 = vmul.f32 %v324, %v331
    %335 = vrot.lane.b32.xlu0 %v333, 32
    %v336 = vpop.permute.xlu0 %335
    %v338 = vadd.f32 %v328, %v336
    %v339 = vtanh.pop %v338
    %341 = vrot.lane.b32.xlu0 %v339, 64
    %v342 = vpop.permute.xlu0 %341
    %v344 = vmul.f32 %v324, %v342
    %346 = vrot.lane.b32.xlu0 %v344, 32
    %v347 = vpop.permute.xlu0 %346
    %v350 = vrot.slane %v291, 4
    %351 = vrot.lane.b32.xlu0 %v350, 64
    %v352 = vpop.permute.xlu0 %351
    %v354 = vsel %vm88, %v347, %v352
    %v356 = vrot.slane %v354, 4
    %v357 = vsel %vm142, %v356, 0
    %359 = vmatpush.msra.mxu0 0.0
    %360 = vmatpush.msra.mxu0 0.0
    %361 = vmatpush.msra.mxu0 0.0
    %362 = vmatpush.msra.mxu0 0.0
    %363 = vmatpush.msra.mxu0 0.0
    %364 = vmatpush.msra.mxu0 0.0
    %365 = vmatpush.msra.mxu0 0.0
    %366 = vmatpush.msra.mxu0 0.0
    %367 = vmatpush.msra.mxu0 %v86
    %368 = vmatpush.msra.mxu0 %v85
    %369 = vmatpush.msra.mxu0 %v84
    %370 = vmatpush.msra.mxu0 %v83
    %371 = vmatpush.msra.mxu0 %v82
    %372 = vmatpush.msra.mxu0 %v81
    %373 = vmatpush.msra.mxu0 %v80
    %374 = vmatpush.msra.mxu0 %v79
    %375 = vmatmul.f32.gmra.mxu0 %v357
    %v376 = vpop.f32.mrf.mxu0
    %v377 = vadd.f32 %v140, %v376
    %378 = vdwg.mxu0
    %v379 = vmul.f32 %v377, %v35
    %v380 = vtanh.pop %v379
    %v381 = vmul.f32 %v35, %v380
    %v382 = vadd.f32 %v381, %v36
    %v383 = vmul.f32 %v382, %v285
    %385 = vrot.lane.b32.xlu0 %v382, 64
    %v386 = vpop.permute.xlu0 %385
    %v388 = vmul.f32 %v382, %v386
    %390 = vrot.lane.b32.xlu0 %v388, 32
    %v391 = vpop.permute.xlu0 %390
    %v393 = vadd.f32 %v383, %v391
    %v394 = vtanh.pop %v393
    %396 = vrot.lane.b32.xlu0 %v394, 64
    %v397 = vpop.permute.xlu0 %396
    %v399 = vmul.f32 %v382, %v397
    %v400 = vrot.slane %v344, 4
    %401 = vrot.lane.b32.xlu0 %v400, 32
    %v402 = vpop.permute.xlu0 %401
    %v403 = vsel %vm88, %v402, 0
    %405 = vmatpush.msra.mxu0 0.0
    %406 = vmatpush.msra.mxu0 0.0
    %407 = vmatpush.msra.mxu0 0.0
    %408 = vmatpush.msra.mxu0 0.0
    %409 = vmatpush.msra.mxu0 0.0
    %410 = vmatpush.msra.mxu0 0.0
    %411 = vmatpush.msra.mxu0 0.0
    %412 = vmatpush.msra.mxu0 0.0
    %413 = vmatpush.msra.mxu0 0.0
    %414 = vmatpush.msra.mxu0 0.0
    %415 = vmatpush.msra.mxu0 0.0
    %416 = vmatpush.msra.mxu0 0.0
    %417 = vmatpush.msra.mxu0 %v78
    %418 = vmatpush.msra.mxu0 %v77
    %419 = vmatpush.msra.mxu0 %v76
    %420 = vmatpush.msra.mxu0 %v75
    %421 = vmatmul.f32.gmra.mxu0 %v403
    %v422 = vpop.f32.mrf.mxu0
    %v423 = vadd.f32 0.0, %v422
    %424 = vdwg.mxu0
    %v426 = vrot.slane %v423, 2
    %v428 = vadd.f32 %v70, %v426
    %v429 = vmul.f32 %v428, %v35
    %v430 = vtanh.pop %v429
    %v431 = vmul.f32 %v35, %v430
    %v432 = vadd.f32 %v431, %v36
    %v434 = vrot.slane %v338, 6
    %v436 = vmul.f32 %v432, %v434
    %438 = vrot.lane.b32.xlu0 %v432, 64
    %v439 = vpop.permute.xlu0 %438
    %v441 = vmul.f32 %v432, %v439
    %443 = vrot.lane.b32.xlu0 %v441, 32
    %v444 = vpop.permute.xlu0 %443
    %v446 = vadd.f32 %v436, %v444
    %v447 = vtanh.pop %v446
    %449 = vrot.lane.b32.xlu0 %v447, 64
    %v450 = vpop.permute.xlu0 %449
    %v452 = vmul.f32 %v432, %v450
    %454 = vrot.lane.b32.xlu0 %v452, 32
    %v455 = vpop.permute.xlu0 %454
    %v458 = vrot.slane %v399, 2
    %459 = vrot.lane.b32.xlu0 %v458, 64
    %v460 = vpop.permute.xlu0 %459
    %v462 = vsel %vm88, %v455, %v460
    %v464 = vrot.slane %v462, 6
    %v465 = vsel %vm142, %v464, 0
    %467 = vmatpush.msra.mxu0 0.0
    %468 = vmatpush.msra.mxu0 0.0
    %469 = vmatpush.msra.mxu0 0.0
    %470 = vmatpush.msra.mxu0 0.0
    %471 = vmatpush.msra.mxu0 0.0
    %472 = vmatpush.msra.mxu0 0.0
    %473 = vmatpush.msra.mxu0 0.0
    %474 = vmatpush.msra.mxu0 0.0
    %475 = vmatpush.msra.mxu0 %v86
    %476 = vmatpush.msra.mxu0 %v85
    %477 = vmatpush.msra.mxu0 %v84
    %478 = vmatpush.msra.mxu0 %v83
    %479 = vmatpush.msra.mxu0 %v82
    %480 = vmatpush.msra.mxu0 %v81
    %481 = vmatpush.msra.mxu0 %v80
    %482 = vmatpush.msra.mxu0 %v79
    %483 = vmatmul.f32.gmra.mxu0 %v465
    %v484 = vpop.f32.mrf.mxu0
    %v485 = vadd.f32 %v140, %v484
    %486 = vdwg.mxu0
    %v487 = vmul.f32 %v485, %v35
    %v488 = vtanh.pop %v487
    %v489 = vmul.f32 %v35, %v488
    %v490 = vadd.f32 %v489, %v36
    %v491 = vmul.f32 %v490, %v393
    %493 = vrot.lane.b32.xlu0 %v490, 64
    %v494 = vpop.permute.xlu0 %493
    %v496 = vmul.f32 %v490, %v494
    %498 = vrot.lane.b32.xlu0 %v496, 32
    %v499 = vpop.permute.xlu0 %498
    %v501 = vadd.f32 %v491, %v499
    %v502 = vtanh.pop %v501
    %504 = vrot.lane.b32.xlu0 %v502, 64
    %v505 = vpop.permute.xlu0 %504
    %v507 = vmul.f32 %v490, %v505
    %v508 = vrot.slane %v452, 6
    %509 = vrot.lane.b32.xlu0 %v508, 32
    %v510 = vpop.permute.xlu0 %509
    %v511 = vsel %vm88, %v510, 0
    %513 = vmatpush.msra.mxu0 0.0
    %514 = vmatpush.msra.mxu0 0.0
    %515 = vmatpush.msra.mxu0 0.0
    %516 = vmatpush.msra.mxu0 0.0
    %517 = vmatpush.msra.mxu0 0.0
    %518 = vmatpush.msra.mxu0 0.0
    %519 = vmatpush.msra.mxu0 0.0
    %520 = vmatpush.msra.mxu0 0.0
    %521 = vmatpush.msra.mxu0 0.0
    %522 = vmatpush.msra.mxu0 0.0
    %523 = vmatpush.msra.mxu0 0.0
    %524 = vmatpush.msra.mxu0 0.0
    %525 = vmatpush.msra.mxu0 %v78
    %526 = vmatpush.msra.mxu0 %v77
    %527 = vmatpush.msra.mxu0 %v76
    %528 = vmatpush.msra.mxu0 %v75
    %529 = vmatmul.f32.gmra.mxu0 %v511
    %v530 = vpop.f32.mrf.mxu0
    %v531 = vadd.f32 0.0, %v530
    %532 = vdwg.mxu0
    %v533 = vadd.f32 %v73, %v531
    %v534 = vmul.f32 %v533, %v35
    %v535 = vtanh.pop %v534
    %v536 = vmul.f32 %v35, %v535
    %v537 = vadd.f32 %v536, %v36
    %v539 = vrot.slane %v446, 6
    %v541 = vmul.f32 %v537, %v539
    %543 = vrot.lane.b32.xlu0 %v537, 64
    %v544 = vpop.permute.xlu0 %543
    %v546 = vmul.f32 %v537, %v544
    %548 = vrot.lane.b32.xlu0 %v546, 32
    %v549 = vpop.permute.xlu0 %548
    %v551 = vadd.f32 %v541, %v549
    %v552 = vtanh.pop %v551
    %554 = vrot.lane.b32.xlu0 %v552, 64
    %v555 = vpop.permute.xlu0 %554
    %v557 = vmul.f32 %v537, %v555
    %559 = vrot.lane.b32.xlu0 %v557, 32
    %v560 = vpop.permute.xlu0 %559
    %563 = vrot.lane.b32.xlu0 %v507, 64
    %v564 = vpop.permute.xlu0 %563
    %v566 = vsel %vm88, %v560, %v564
    %v568 = vsel %vm142, %v566, 0
    %570 = vmatpush.msra.mxu0 0.0
    %571 = vmatpush.msra.mxu0 0.0
    %572 = vmatpush.msra.mxu0 0.0
    %573 = vmatpush.msra.mxu0 0.0
    %574 = vmatpush.msra.mxu0 0.0
    %575 = vmatpush.msra.mxu0 0.0
    %576 = vmatpush.msra.mxu0 0.0
    %577 = vmatpush.msra.mxu0 0.0
    %578 = vmatpush.msra.mxu0 %v86
    %579 = vmatpush.msra.mxu0 %v85
    %580 = vmatpush.msra.mxu0 %v84
    %581 = vmatpush.msra.mxu0 %v83
    %582 = vmatpush.msra.mxu0 %v82
    %583 = vmatpush.msra.mxu0 %v81
    %584 = vmatpush.msra.mxu0 %v80
    %585 = vmatpush.msra.mxu0 %v79
    %586 = vmatmul.f32.gmra.mxu0 %v568
    %v587 = vpop.f32.mrf.mxu0
    %v588 = vadd.f32 %v140, %v587
    %589 = vdwg.mxu0
    %v590 = vmul.f32 %v588, %v35
    %v591 = vtanh.pop %v590
    %v592 = vmul.f32 %v35, %v591
    %v593 = vadd.f32 %v592, %v36
    %v594 = vmul.f32 %v593, %v501
    %596 = vrot.lane.b32.xlu0 %v593, 64
    %v597 = vpop.permute.xlu0 %596
    %v599 = vmul.f32 %v593, %v597
    %601 = vrot.lane.b32.xlu0 %v599, 32
    %v602 = vpop.permute.xlu0 %601
    %v604 = vadd.f32 %v594, %v602
    %v605 = vtanh.pop %v604
    %607 = vrot.lane.b32.xlu0 %v605, 64
    %v608 = vpop.permute.xlu0 %607
    %v610 = vmul.f32 %v593, %v608
    %v611 = vsel %vm88, %v560, 0
    %613 = vmatpush.msra.mxu0 0.0
    %614 = vmatpush.msra.mxu0 0.0
    %615 = vmatpush.msra.mxu0 0.0
    %616 = vmatpush.msra.mxu0 0.0
    %617 = vmatpush.msra.mxu0 0.0
    %618 = vmatpush.msra.mxu0 0.0
    %619 = vmatpush.msra.mxu0 0.0
    %620 = vmatpush.msra.mxu0 0.0
    %621 = vmatpush.msra.mxu0 0.0
    %622 = vmatpush.msra.mxu0 0.0
    %623 = vmatpush.msra.mxu0 0.0
    %624 = vmatpush.msra.mxu0 0.0
    %625 = vmatpush.msra.mxu0 %v78
    %626 = vmatpush.msra.mxu0 %v77
    %627 = vmatpush.msra.mxu0 %v76
    %628 = vmatpush.msra.mxu0 %v75
    %629 = vmatmul.f32.gmra.mxu0 %v611
    %v630 = vpop.f32.mrf.mxu0
    %v631 = vadd.f32 0.0, %v630
    %632 = vdwg.mxu0
    %v634 = vrot.slane %v631, 6
    %v636 = vadd.f32 %v73, %v634
    %v637 = vmul.f32 %v636, %v35
    %v638 = vtanh.pop %v637
    %v639 = vmul.f32 %v35, %v638
    %v640 = vadd.f32 %v639, %v36
    %v642 = vrot.slane %v551, 6
    %v644 = vmul.f32 %v640, %v642
    %646 = vrot.lane.b32.xlu0 %v640, 64
    %v647 = vpop.permute.xlu0 %646
    %v649 = vmul.f32 %v640, %v647
    %651 = vrot.lane.b32.xlu0 %v649, 32
    %v652 = vpop.permute.xlu0 %651
    %v654 = vadd.f32 %v644, %v652
    %v655 = vtanh.pop %v654
    %657 = vrot.lane.b32.xlu0 %v655, 64
    %v658 = vpop.permute.xlu0 %657
    %v660 = vmul.f32 %v640, %v658
    %662 = vrot.lane.b32.xlu0 %v660, 32
    %v663 = vpop.permute.xlu0 %662
    %v666 = vrot.slane %v610, 6
    %667 = vrot.lane.b32.xlu0 %v666, 64
    %v668 = vpop.permute.xlu0 %667
    %v670 = vsel %vm88, %v663, %v668
    %v672 = vrot.slane %v670, 2
    %v673 = vsel %vm142, %v672, 0
    %675 = vmatpush.msra.mxu0 0.0
    %676 = vmatpush.msra.mxu0 0.0
    %677 = vmatpush.msra.mxu0 0.0
    %678 = vmatpush.msra.mxu0 0.0
    %679 = vmatpush.msra.mxu0 0.0
    %680 = vmatpush.msra.mxu0 0.0
    %681 = vmatpush.msra.mxu0 0.0
    %682 = vmatpush.msra.mxu0 0.0
    %683 = vmatpush.msra.mxu0 %v86
    %684 = vmatpush.msra.mxu0 %v85
    %685 = vmatpush.msra.mxu0 %v84
    %686 = vmatpush.msra.mxu0 %v83
    %687 = vmatpush.msra.mxu0 %v82
    %688 = vmatpush.msra.mxu0 %v81
    %689 = vmatpush.msra.mxu0 %v80
    %690 = vmatpush.msra.mxu0 %v79
    %691 = vmatmul.f32.gmra.mxu0 %v673
    %v692 = vpop.f32.mrf.mxu0
    %v693 = vadd.f32 %v140, %v692
    %694 = vdwg.mxu0
    %v695 = vmul.f32 %v693, %v35
    %v696 = vtanh.pop %v695
    %v697 = vmul.f32 %v35, %v696
    %v698 = vadd.f32 %v697, %v36
    %v699 = vmul.f32 %v698, %v604
    %701 = vrot.lane.b32.xlu0 %v698, 64
    %v702 = vpop.permute.xlu0 %701
    %v704 = vmul.f32 %v698, %v702
    %706 = vrot.lane.b32.xlu0 %v704, 32
    %v707 = vpop.permute.xlu0 %706
    %v709 = vadd.f32 %v699, %v707
    %v710 = vtanh.pop %v709
    %712 = vrot.lane.b32.xlu0 %v710, 64
    %v713 = vpop.permute.xlu0 %712
    %v715 = vmul.f32 %v698, %v713
    %v716 = vrot.slane %v660, 2
    %717 = vrot.lane.b32.xlu0 %v716, 32
    %v718 = vpop.permute.xlu0 %717
    %v719 = vsel %vm88, %v718, 0
    %721 = vmatpush.msra.mxu0 0.0
    %722 = vmatpush.msra.mxu0 0.0
    %723 = vmatpush.msra.mxu0 0.0
    %724 = vmatpush.msra.mxu0 0.0
    %725 = vmatpush.msra.mxu0 0.0
    %726 = vmatpush.msra.mxu0 0.0
    %727 = vmatpush.msra.mxu0 0.0
    %728 = vmatpush.msra.mxu0 0.0
    %729 = vmatpush.msra.mxu0 0.0
    %730 = vmatpush.msra.mxu0 0.0
    %731 = vmatpush.msra.mxu0 0.0
    %732 = vmatpush.msra.mxu0 0.0
    %733 = vmatpush.msra.mxu0 %v78
    %734 = vmatpush.msra.mxu0 %v77
    %735 = vmatpush.msra.mxu0 %v76
    %736 = vmatpush.msra.mxu0 %v75
    %737 = vmatmul.f32.gmra.mxu0 %v719
    %v738 = vpop.f32.mrf.mxu0
    %v739 = vadd.f32 0.0, %v738
    %740 = vdwg.mxu0
    %v742 = vrot.slane %v739, 4
    %v744 = vadd.f32 %v73, %v742
    %v745 = vmul.f32 %v744, %v35
    %v746 = vtanh.pop %v745
    %v747 = vmul.f32 %v35, %v746
    %v748 = vadd.f32 %v747, %v36
    %v750 = vrot.slane %v654, 6
    %v752 = vmul.f32 %v748, %v750
    %754 = vrot.lane.b32.xlu0 %v748, 64
    %v755 = vpop.permute.xlu0 %754
    %v757 = vmul.f32 %v748, %v755
    %759 = vrot.lane.b32.xlu0 %v757, 32
    %v760 = vpop.permute.xlu0 %759
    %v762 = vadd.f32 %v752, %v760
    %v763 = vtanh.pop %v762
    %765 = vrot.lane.b32.xlu0 %v763, 64
    %v766 = vpop.permute.xlu0 %765
    %v768 = vmul.f32 %v748, %v766
    %770 = vrot.lane.b32.xlu0 %v768, 32
    %v771 = vpop.permute.xlu0 %770
    %v774 = vrot.slane %v715, 4
    %775 = vrot.lane.b32.xlu0 %v774, 64
    %v776 = vpop.permute.xlu0 %775
    %v778 = vsel %vm88, %v771, %v776
    %v780 = vrot.slane %v778, 4
    %v781 = vsel %vm142, %v780, 0
    %783 = vmatpush.msra.mxu0 0.0
    %784 = vmatpush.msra.mxu0 0.0
    %785 = vmatpush.msra.mxu0 0.0
    %786 = vmatpush.msra.mxu0 0.0
    %787 = vmatpush.msra.mxu0 0.0
    %788 = vmatpush.msra.mxu0 0.0
    %789 = vmatpush.msra.mxu0 0.0
    %790 = vmatpush.msra.mxu0 0.0
    %791 = vmatpush.msra.mxu0 %v86
    %792 = vmatpush.msra.mxu0 %v85
    %793 = vmatpush.msra.mxu0 %v84
    %794 = vmatpush.msra.mxu0 %v83
    %795 = vmatpush.msra.mxu0 %v82
    %796 = vmatpush.msra.mxu0 %v81
    %797 = vmatpush.msra.mxu0 %v80
    %798 = vmatpush.msra.mxu0 %v79
    %799 = vmatmul.f32.gmra.mxu0 %v781
    %v800 = vpop.f32.mrf.mxu0
    %v801 = vadd.f32 %v140, %v800
    %802 = vdwg.mxu0
    %v803 = vmul.f32 %v801, %v35
    %v804 = vtanh.pop %v803
    %v805 = vmul.f32 %v35, %v804
    %v806 = vadd.f32 %v805, %v36
    %v807 = vmul.f32 %v806, %v709
    %809 = vrot.lane.b32.xlu0 %v806, 64
    %v810 = vpop.permute.xlu0 %809
    %v812 = vmul.f32 %v806, %v810
    %814 = vrot.lane.b32.xlu0 %v812, 32
    %v815 = vpop.permute.xlu0 %814
    %v817 = vadd.f32 %v807, %v815
    %v818 = vtanh.pop %v817
    %820 = vrot.lane.b32.xlu0 %v818, 64
    %v821 = vpop.permute.xlu0 %820
    %v823 = vmul.f32 %v806, %v821
    %v824 = vrot.slane %v768, 4
    %825 = vrot.lane.b32.xlu0 %v824, 32
    %v826 = vpop.permute.xlu0 %825
    %v827 = vsel %vm88, %v826, 0
    %829 = vmatpush.msra.mxu0 0.0
    %830 = vmatpush.msra.mxu0 0.0
    %831 = vmatpush.msra.mxu0 0.0
    %832 = vmatpush.msra.mxu0 0.0
    %833 = vmatpush.msra.mxu0 0.0
    %834 = vmatpush.msra.mxu0 0.0
    %835 = vmatpush.msra.mxu0 0.0
    %836 = vmatpush.msra.mxu0 0.0
    %837 = vmatpush.msra.mxu0 0.0
    %838 = vmatpush.msra.mxu0 0.0
    %839 = vmatpush.msra.mxu0 0.0
    %840 = vmatpush.msra.mxu0 0.0
    %841 = vmatpush.msra.mxu0 %v78
    %842 = vmatpush.msra.mxu0 %v77
    %843 = vmatpush.msra.mxu0 %v76
    %844 = vmatpush.msra.mxu0 %v75
    %845 = vmatmul.f32.gmra.mxu0 %v827
    %v846 = vpop.f32.mrf.mxu0
    %v847 = vadd.f32 0.0, %v846
    %848 = vdwg.mxu0
    %v850 = vrot.slane %v847, 2
    %v852 = vadd.f32 %v73, %v850
    %v853 = vmul.f32 %v852, %v35
    %v854 = vtanh.pop %v853
    %v855 = vmul.f32 %v35, %v854
    %v856 = vadd.f32 %v855, %v36
    %v858 = vrot.slane %v762, 6
    %v860 = vmul.f32 %v856, %v858
    %862 = vrot.lane.b32.xlu0 %v856, 64
    %v863 = vpop.permute.xlu0 %862
    %v865 = vmul.f32 %v856, %v863
    %867 = vrot.lane.b32.xlu0 %v865, 32
    %v868 = vpop.permute.xlu0 %867
    %v870 = vadd.f32 %v860, %v868
    %v871 = vtanh.pop %v870
    %873 = vrot.lane.b32.xlu0 %v871, 64
    %v874 = vpop.permute.xlu0 %873
    %v876 = vmul.f32 %v856, %v874
    %878 = vrot.lane.b32.xlu0 %v876, 32
    %v879 = vpop.permute.xlu0 %878
    %v882 = vrot.slane %v823, 2
    %883 = vrot.lane.b32.xlu0 %v882, 64
    %v884 = vpop.permute.xlu0 %883
    %v886 = vsel %vm88, %v879, %v884
    %v888 = vrot.slane %v886, 6
    %v889 = vsel %vm142, %v888, 0
    %891 = vmatpush.msra.mxu0 0.0
    %892 = vmatpush.msra.mxu0 0.0
    %893 = vmatpush.msra.mxu0 0.0
    %894 = vmatpush.msra.mxu0 0.0
    %895 = vmatpush.msra.mxu0 0.0
    %896 = vmatpush.msra.mxu0 0.0
    %897 = vmatpush.msra.mxu0 0.0
    %898 = vmatpush.msra.mxu0 0.0
    %899 = vmatpush.msra.mxu0 %v86
    %900 = vmatpush.msra.mxu0 %v85
    %901 = vmatpush.msra.mxu0 %v84
    %902 = vmatpush.msra.mxu0 %v83
    %903 = vmatpush.msra.mxu0 %v82
    %904 = vmatpush.msra.mxu0 %v81
    %905 = vmatpush.msra.mxu0 %v80
    %906 = vmatpush.msra.mxu0 %v79
    %907 = vmatmul.f32.gmra.mxu0 %v889
    %v908 = vpop.f32.mrf.mxu0
    %v909 = vadd.f32 %v140, %v908
    %910 = vdwg.mxu0
    %v911 = vmul.f32 %v909, %v35
    %v912 = vtanh.pop %v911
    %v913 = vmul.f32 %v35, %v912
    %v914 = vadd.f32 %v913, %v36
    %v915 = vmul.f32 %v914, %v817
    %917 = vrot.lane.b32.xlu0 %v914, 64
    %v918 = vpop.permute.xlu0 %917
    %v920 = vmul.f32 %v914, %v918
    %922 = vrot.lane.b32.xlu0 %v920, 32
    %v923 = vpop.permute.xlu0 %922
    %v925 = vadd.f32 %v915, %v923
    %v926 = vtanh.pop %v925
    %928 = vrot.lane.b32.xlu0 %v926, 64
    %v929 = vpop.permute.xlu0 %928
    %v931 = vmul.f32 %v914, %v929
    %v932 = vld [vmem:[%s6] sm:$0xff]
    %v933 = vld [vmem:[%s6 + $0x8] sm:$0xff]
    %v934 = vld [vmem:[%s6 + $0x10] sm:$0xff]
    %v935 = vld [vmem:[%s6 + $0x18] sm:$0xff]
    %v936 = vld [vmem:[%s7] sm:$0x1]
    %v938 = vperm.slane %v936, 0
    %941 = vrot.lane.b32.xlu0 %v931, 32
    %v942 = vpop.permute.xlu0 %941
    %v943 = vsel %vm88, %v942, 0
    %945 = vmatpush.msra.mxu0 0.0
    %946 = vmatpush.msra.mxu0 0.0
    %947 = vmatpush.msra.mxu0 0.0
    %948 = vmatpush.msra.mxu0 0.0
    %949 = vmatpush.msra.mxu0 0.0
    %950 = vmatpush.msra.mxu0 0.0
    %951 = vmatpush.msra.mxu0 0.0
    %952 = vmatpush.msra.mxu0 0.0
    %953 = vmatpush.msra.mxu0 0.0
    %954 = vmatpush.msra.mxu0 0.0
    %955 = vmatpush.msra.mxu0 0.0
    %956 = vmatpush.msra.mxu0 0.0
    %957 = vmatpush.msra.mxu0 %v935
    %958 = vmatpush.msra.mxu0 %v934
    %959 = vmatpush.msra.mxu0 %v933
    %960 = vmatpush.msra.mxu0 %v932
    %961 = vmatmul.f32.gmra.mxu0 %v943
    %v962 = vpop.f32.mrf.mxu0
    %v963 = vadd.f32 %v938, %v962
    %964 = vdwg.mxu0
    %vm965 = vcmask 9216
    %966 = vst.msk [vmem:[#allocation2] sm:$0x3] %vm965, %v963
    // Predicated region
    $region34: #{lstm_forward.1} parent=1 // pred_check
      _
    $region35: #{lstm_forward.1} parent=1 // pred_check_branch
      %968 = sbr.rel (0) target = $region37
    $region36: #{lstm_forward.1} parent=1 // pred_region
      %970 = vsyncadd [#allocation3], 0
      %s972 = sshll.u32 [#allocation2], 4
      %s973 = int_to_ptr.vmem [resolvable:$true] %s972
      %s974 = sshll.u32 %s8, 4
      %s975 = int_to_ptr.hbm [resolvable:$true] %s974
      %977 = dma.vmem_to_hbm [thread:$0]  %s973, 32, %s975, [#allocation3]
    $region37: #{lstm_forward.1} parent=1 // pred_fallthru
      _
    // Predicated region
    $region38: #{lstm_forward.1} parent=1 // pred_check
      _
    $region39: #{lstm_forward.1} parent=1 // pred_check_branch
      %979 = sbr.rel (0) target = $region41
    $region40: #{lstm_forward.1} parent=1 // pred_region
      %981 = dma.done [#allocation3], 32
    $region41: #{lstm_forward.1} parent=1 // pred_fallthru
      _
    %982 = vsyncpa [#allocation3], 1

</llo_original>
